<compile_context>
chip_gen: v7x
topology: tpu7x:2x2x1
jax: 0.10.0
libtpu: 0.0.40
codegen_flags: <defaults>
</compile_context>

<pallas_src>
import functools

import jax
import jax.numpy as jnp
import numpy as np
from jax.experimental import pallas as pl
from jax.experimental.pallas import tpu as pltpu

EMBEDDING_DIM = 10
NUM_FEATURES = 7                      # user, book, location, age, author, year, publisher
OUT_REAL = NUM_FEATURES * EMBEDDING_DIM            # 70
OUT_PAD = pl.cdiv(OUT_REAL, 128) * 128             # 128 (lane-dense output)


def _round_up(x, m):
    return ((x + m - 1) // m) * m


# ---------------------------------------------------------------------------
# Kernel: one fused matmul per batch tile.
# ---------------------------------------------------------------------------
def fused_embedding_kernel(ids_ref, av_ref, w_ref, out_ref, *,
                           k_pad, age_col, year_col, bias_col):
    ids = ids_ref[...]                                   # (TB, 8) int32, cols 0..4 = offset ids
    av = av_ref[...]                                     # (TB, 2) f32, col 0 = age, col 1 = year
    tb = ids.shape[0]

    iota = jax.lax.broadcasted_iota(jnp.int32, (tb, k_pad), 1)

    # One-hot rows for the 5 id features (offsets were added in the wrapper, so the
    # hit columns land in disjoint row-ranges of W_fused).
    sel = (iota == ids[:, 0:1]).astype(jnp.float32)
    for k in range(1, 5):
        sel = sel + (iota == ids[:, k:k + 1]).astype(jnp.float32)

    # Linear(1, D) features: selector value is the raw scalar; bias row selected by 1.0.
    sel = sel + av[:, 0:1] * (iota == age_col).astype(jnp.float32)
    sel = sel + av[:, 1:2] * (iota == year_col).astype(jnp.float32)
    sel = sel + (iota == bias_col).astype(jnp.float32)

    # Single MXU pass; biases already folded into W_fused's bias row.
    out_ref[...] = jnp.dot(sel, w_ref[...], preferred_element_type=jnp.float32)


# ---------------------------------------------------------------------------
# Host-side, one-time weight fusion (zero runtime cost).
# ---------------------------------------------------------------------------
def prepare_fused_params(params, sizes, d=EMBEDDING_DIM):
    """sizes = [num_users, num_books, num_locations, num_authors, num_publishers]."""
    offs = np.concatenate([[0], np.cumsum(sizes)]).astype(np.int64)
    n_id_rows = int(offs[-1])
    age_col = n_id_rows
    year_col = n_id_rows + 1
    bias_col = n_id_rows + 2
    k_real = n_id_rows + 3
    k_pad = pl.cdiv(k_real, 256) * 256                   # aligned K for the MXU

    w = np.zeros((k_pad, OUT_PAD), np.float32)
    tabs = [params["user_tab"], params["book_tab"], params["loc_tab"],
            params["author_tab"], params["pub_tab"]]
    # Output band per feature (torch concat order): user, book, loc, age, author, year, pub
    id_bands = [0, 1, 2, 4, 6]
    for k, (tab, band) in enumerate(zip(tabs, id_bands)):
        tab = np.asarray(tab)
        w[offs[k]:offs[k] + tab.shape[0], band * d:(band + 1) * d] = tab
    w[age_col, 3 * d:4 * d] = np.asarray(params["w_age"])[0]
    w[year_col, 5 * d:6 * d] = np.asarray(params["w_year"])[0]
    w[bias_col, 3 * d:4 * d] = np.asarray(params["b_age"])[0]
    w[bias_col, 5 * d:6 * d] = np.asarray(params["b_year"])[0]

    return {
        "w_fused": jnp.asarray(w),
        "id_offsets": tuple(int(o) for o in offs[:5]),
        "age_col": age_col, "year_col": year_col, "bias_col": bias_col,
        "k_pad": k_pad,
    }


# ---------------------------------------------------------------------------
# Forward wrapper.
# ---------------------------------------------------------------------------
def embedding_net_forward(user_id, book_id, location_id, age, author_id, year,
                          publisher_id, fused):
    b = user_id.shape[0]
    offs = fused["id_offsets"]
    k_pad = fused["k_pad"]

    # Pack the 5 id columns (with table offsets pre-added) into one (B, 8) int32 array,
    # and age/year into one (B, 2) f32 array -> 3 inputs / DMAs total.
    ids = jnp.concatenate(
        [user_id + offs[0], book_id + offs[1], location_id + offs[2],
         author_id + offs[3], publisher_id + offs[4],
         jnp.full((b, 3), -1, jnp.int32)], axis=1).astype(jnp.int32)
    av = jnp.concatenate([age, year], axis=1).astype(jnp.float32)

    # Batch tiling: TB rows per grid step (multiple of 8 sublanes).
    tb = min(512, _round_up(b, 8))
    b_pad = _round_up(b, tb)
    if b_pad != b:
        ids = jnp.pad(ids, ((0, b_pad - b), (0, 0)), constant_values=-1)
        av = jnp.pad(av, ((0, b_pad - b), (0, 0)))

    kernel = functools.partial(
        fused_embedding_kernel, k_pad=k_pad,
        age_col=fused["age_col"], year_col=fused["year_col"],
        bias_col=fused["bias_col"])

    out_padded = pl.pallas_call(
        kernel,
        out_shape=jax.ShapeDtypeStruct((b_pad, OUT_PAD), jnp.float32),
        grid_spec=pltpu.PrefetchScalarGridSpec(
            num_scalar_prefetch=0,
            grid=(b_pad // tb,),
            in_specs=[
                pl.BlockSpec((tb, 8), lambda i: (i, 0)),        # ids tile
                pl.BlockSpec((tb, 2), lambda i: (i, 0)),        # age/year tile
                pl.BlockSpec((k_pad, OUT_PAD), lambda i: (0, 0)),  # fused weight (resident)
            ],
            out_specs=pl.BlockSpec((tb, OUT_PAD), lambda i: (i, 0)),
        ),
        compiler_params=pltpu.CompilerParams(
            dimension_semantics=("parallel",)),
    )(ids, av, fused["w_fused"])

    return out_padded[:b, :OUT_REAL]


# ---------------------------------------------------------------------------
# Unfused parameter init + pure-JAX reference (matches the PyTorch forward).
# ---------------------------------------------------------------------------
def init_params(key, num_users, num_books, num_locations, num_authors,
                num_publishers, d):
    ks = jax.random.split(key, 9)
    return {
        "user_tab": jax.random.normal(ks[0], (num_users, d), jnp.float32),
        "book_tab": jax.random.normal(ks[1], (num_books, d), jnp.float32),
        "loc_tab": jax.random.normal(ks[2], (num_locations, d), jnp.float32),
        "author_tab": jax.random.normal(ks[3], (num_authors, d), jnp.float32),
        "pub_tab": jax.random.normal(ks[4], (num_publishers, d), jnp.float32),
        # torch Linear(1, D): stored as W^T (1, D), bias (1, D)
        "w_age": jax.random.normal(ks[5], (1, d), jnp.float32) * 0.1,
        "b_age": jax.random.normal(ks[6], (1, d), jnp.float32) * 0.1,
        "w_year": jax.random.normal(ks[7], (1, d), jnp.float32) * 0.1,
        "b_year": jax.random.normal(ks[8], (1, d), jnp.float32) * 0.1,
    }


def reference_forward(user_id, book_id, location_id, age, author_id, year,
                      publisher_id, p):
    user_e = p["user_tab"][user_id[:, 0]]
    book_e = p["book_tab"][book_id[:, 0]]
    loc_e = p["loc_tab"][location_id[:, 0]]
    author_e = p["author_tab"][author_id[:, 0]]
    pub_e = p["pub_tab"][publisher_id[:, 0]]
    age_e = age @ p["w_age"] + p["b_age"]
    year_e = year @ p["w_year"] + p["b_year"]
    return jnp.concatenate(
        [user_e, book_e, loc_e, age_e, author_e, year_e, pub_e], axis=-1)


if __name__ == "__main__":
    key = jax.random.PRNGKey(0)
    B = 8
    num_users, num_books = 37, 53
    num_locations, num_authors, num_publishers = 19, 29, 23
    sizes = [num_users, num_books, num_locations, num_authors, num_publishers]

    kp, k1, k2, k3, k4, k5, k6, k7 = jax.random.split(key, 8)
    params = init_params(kp, num_users, num_books, num_locations, num_authors,
                         num_publishers, EMBEDDING_DIM)
    fused = prepare_fused_params(params, sizes)

    user_id = jax.random.randint(k1, (B, 1), 0, num_users, jnp.int32)
    book_id = jax.random.randint(k2, (B, 1), 0, num_books, jnp.int32)
    location_id = jax.random.randint(k3, (B, 1), 0, num_locations, jnp.int32)
    author_id = jax.random.randint(k4, (B, 1), 0, num_authors, jnp.int32)
    publisher_id = jax.random.randint(k5, (B, 1), 0, num_publishers, jnp.int32)
    age = jax.random.uniform(k6, (B, 1), jnp.float32, 10.0, 80.0)
    year = jax.random.uniform(k7, (B, 1), jnp.float32, 1950.0, 2020.0)

    out = embedding_net_forward(user_id, book_id, location_id, age,
                                author_id, year, publisher_id, fused)
    out = jax.block_until_ready(out)

    ref = reference_forward(user_id, book_id, location_id, age,
                            author_id, year, publisher_id, params)
    assert out.shape == (B, OUT_REAL)
    np.testing.assert_allclose(np.asarray(out), np.asarray(ref),
                               rtol=1e-5, atol=1e-4)
    print("KERNEL_OK")
</pallas_src>

<mosaic_0001>
module attributes {stable_mosaic.version = 11 : i64} {
  func.func @fused_embedding_kernel(%arg0: i32, %arg1: memref<8x8xi32, #tpu.memory_space<vmem>>, %arg2: memref<8x2xf32, #tpu.memory_space<vmem>>, %arg3: memref<256x128xf32, #tpu.memory_space<vmem>>, %arg4: memref<8x128xf32, #tpu.memory_space<vmem>>) attributes {dimension_semantics = [#tpu.dimension_semantics<parallel>], iteration_bounds = array<i64: 1>, scalar_prefetch = 0 : i64, scratch_operands = 0 : i64, tpu.core_type = #tpu.core_type<tc>, window_params = [{transform_indices = @transform_0, window_bounds = array<i64: 8, 8>}, {transform_indices = @transform_1, window_bounds = array<i64: 8, 2>}, {pipeline_mode = #tpu.pipeline_mode<synchronous>, transform_indices = @transform_2, window_bounds = array<i64: 256, 128>}, {transform_indices = @transform_3, window_bounds = array<i64: 8, 128>}]} {
    %c0 = arith.constant 0 : index
    %c0_0 = arith.constant 0 : index
    %0 = vector.load %arg1[%c0, %c0_0] : memref<8x8xi32, #tpu.memory_space<vmem>>, vector<8x8xi32>
    %c0_1 = arith.constant 0 : index
    %c0_2 = arith.constant 0 : index
    %1 = vector.load %arg2[%c0_1, %c0_2] : memref<8x2xf32, #tpu.memory_space<vmem>>, vector<8x2xf32>
    %2 = tpu.iota {dimensions = array<i32: 1>} : vector<8x256xi32>
    %3 = vector.extract_strided_slice %0 {offsets = [0, 0], sizes = [8, 1], strides = [1, 1]} : vector<8x8xi32> to vector<8x1xi32>
    %4 = vector.broadcast %3 : vector<8x1xi32> to vector<8x256xi32>
    %5 = arith.cmpi eq, %2, %4 : vector<8x256xi32>
    %6 = arith.extui %5 : vector<8x256xi1> to vector<8x256xi32>
    %7 = arith.sitofp %6 : vector<8x256xi32> to vector<8x256xf32>
    %8 = vector.extract_strided_slice %0 {offsets = [0, 1], sizes = [8, 1], strides = [1, 1]} : vector<8x8xi32> to vector<8x1xi32>
    %9 = vector.broadcast %8 : vector<8x1xi32> to vector<8x256xi32>
    %10 = arith.cmpi eq, %2, %9 : vector<8x256xi32>
    %11 = arith.extui %10 : vector<8x256xi1> to vector<8x256xi32>
    %12 = arith.sitofp %11 : vector<8x256xi32> to vector<8x256xf32>
    %13 = arith.addf %7, %12 : vector<8x256xf32>
    %14 = vector.extract_strided_slice %0 {offsets = [0, 2], sizes = [8, 1], strides = [1, 1]} : vector<8x8xi32> to vector<8x1xi32>
    %15 = vector.broadcast %14 : vector<8x1xi32> to vector<8x256xi32>
    %16 = arith.cmpi eq, %2, %15 : vector<8x256xi32>
    %17 = arith.extui %16 : vector<8x256xi1> to vector<8x256xi32>
    %18 = arith.sitofp %17 : vector<8x256xi32> to vector<8x256xf32>
    %19 = arith.addf %13, %18 : vector<8x256xf32>
    %20 = vector.extract_strided_slice %0 {offsets = [0, 3], sizes = [8, 1], strides = [1, 1]} : vector<8x8xi32> to vector<8x1xi32>
    %21 = vector.broadcast %20 : vector<8x1xi32> to vector<8x256xi32>
    %22 = arith.cmpi eq, %2, %21 : vector<8x256xi32>
    %23 = arith.extui %22 : vector<8x256xi1> to vector<8x256xi32>
    %24 = arith.sitofp %23 : vector<8x256xi32> to vector<8x256xf32>
    %25 = arith.addf %19, %24 : vector<8x256xf32>
    %26 = vector.extract_strided_slice %0 {offsets = [0, 4], sizes = [8, 1], strides = [1, 1]} : vector<8x8xi32> to vector<8x1xi32>
    %27 = vector.broadcast %26 : vector<8x1xi32> to vector<8x256xi32>
    %28 = arith.cmpi eq, %2, %27 : vector<8x256xi32>
    %29 = arith.extui %28 : vector<8x256xi1> to vector<8x256xi32>
    %30 = arith.sitofp %29 : vector<8x256xi32> to vector<8x256xf32>
    %31 = arith.addf %25, %30 : vector<8x256xf32>
    %32 = vector.extract_strided_slice %1 {offsets = [0, 0], sizes = [8, 1], strides = [1, 1]} : vector<8x2xf32> to vector<8x1xf32>
    %c161_i32 = arith.constant 161 : i32
    %33 = vector.broadcast %c161_i32 : i32 to vector<8x256xi32>
    %34 = arith.cmpi eq, %2, %33 : vector<8x256xi32>
    %35 = arith.extui %34 : vector<8x256xi1> to vector<8x256xi32>
    %36 = arith.sitofp %35 : vector<8x256xi32> to vector<8x256xf32>
    %37 = vector.broadcast %32 : vector<8x1xf32> to vector<8x256xf32>
    %38 = arith.mulf %37, %36 : vector<8x256xf32>
    %39 = arith.addf %31, %38 : vector<8x256xf32>
    %40 = vector.extract_strided_slice %1 {offsets = [0, 1], sizes = [8, 1], strides = [1, 1]} : vector<8x2xf32> to vector<8x1xf32>
    %c162_i32 = arith.constant 162 : i32
    %41 = vector.broadcast %c162_i32 : i32 to vector<8x256xi32>
    %42 = arith.cmpi eq, %2, %41 : vector<8x256xi32>
    %43 = arith.extui %42 : vector<8x256xi1> to vector<8x256xi32>
    %44 = arith.sitofp %43 : vector<8x256xi32> to vector<8x256xf32>
    %45 = vector.broadcast %40 : vector<8x1xf32> to vector<8x256xf32>
    %46 = arith.mulf %45, %44 : vector<8x256xf32>
    %47 = arith.addf %39, %46 : vector<8x256xf32>
    %c163_i32 = arith.constant 163 : i32
    %48 = vector.broadcast %c163_i32 : i32 to vector<8x256xi32>
    %49 = arith.cmpi eq, %2, %48 : vector<8x256xi32>
    %50 = arith.extui %49 : vector<8x256xi1> to vector<8x256xi32>
    %51 = arith.sitofp %50 : vector<8x256xi32> to vector<8x256xf32>
    %52 = arith.addf %47, %51 : vector<8x256xf32>
    %c0_3 = arith.constant 0 : index
    %c0_4 = arith.constant 0 : index
    %53 = vector.load %arg3[%c0_3, %c0_4] : memref<256x128xf32, #tpu.memory_space<vmem>>, vector<256x128xf32>
    %cst = arith.constant dense<0.000000e+00> : vector<8x128xf32>
    %54 = tpu.matmul %52, %53, %cst {dimension_numbers = #tpu.dot_dimension_numbers<[1], [0], [0], [1], [0, 0, 1, 1], [], []>} : vector<8x256xf32>, vector<256x128xf32>, vector<8x128xf32> -> vector<8x128xf32>
    %c0_5 = arith.constant 0 : index
    %c0_6 = arith.constant 0 : index
    %55 = vector.load %arg4[%c0_5, %c0_6] : memref<8x128xf32, #tpu.memory_space<vmem>>, vector<8x128xf32>
    tpu.vector_store %arg4[%c0_5, %c0_6], %54 {strides = array<i32>} : memref<8x128xf32, #tpu.memory_space<vmem>>, vector<8x128xf32>,
    return
  }
  func.func @transform_0(%arg0: i32) -> (i32, i32) {
    %c0_i32 = arith.constant 0 : i32
    %c0_i32_0 = arith.constant 0 : i32
    return %arg0, %c0_i32 : i32, i32
  }
  func.func @transform_1(%arg0: i32) -> (i32, i32) {
    %c0_i32 = arith.constant 0 : i32
    %c0_i32_0 = arith.constant 0 : i32
    return %arg0, %c0_i32 : i32, i32
  }
  func.func @transform_2(%arg0: i32) -> (i32, i32) {
    %c0_i32 = arith.constant 0 : i32
    %c0_i32_0 = arith.constant 0 : i32
    %c0_i32_1 = arith.constant 0 : i32
    return %c0_i32, %c0_i32_0 : i32, i32
  }
  func.func @transform_3(%arg0: i32) -> (i32, i32) {
    %c0_i32 = arith.constant 0 : i32
    %c0_i32_0 = arith.constant 0 : i32
    return %arg0, %c0_i32 : i32, i32
  }
}

</mosaic_0001>

<llo_original>
// kernel: tpu_custom_call.1
$region0: #{tpu_custom_call.1}
  #allocation0 [shape = 'u32[]', space=smem, size = 0x4, offset = 0x4, fixed_abs, tag = 'smem constant byte address 0x4 - core index']
  #allocation1 [shape = 'u32[144,128]{1,0:T(1,128)}', space=vmem, size = 0x12000, scoped, tag = 'internal scratch']
  %s0 = inlined_call_operand.vmem [shape: s32[8,8], index: 0, kind: input, shape index: {}]
  %s1 = inlined_call_operand.vmem [shape: f32[8,2], index: 1, kind: input, shape index: {}]
  %s2 = inlined_call_operand.hbm [shape: f32[256,128], index: 2, kind: input, shape index: {}]
  %s3 = inlined_call_operand.hbm [shape: f32[8,128], index: 3, kind: output, shape index: {}]
  %s4 = sld [smem:[#allocation0]]
  $region26: #{tpu_custom_call.1} parent=0
    _
  %s6 = ssub.s32 1, %s4
  %s7 = scalar_select 0, %s6, %s4
  $region1: #{tpu_custom_call.1} parent=0
    #allocation2 [shape = 'u8[131072]{0}', space=vmem, size = 0x20000, scoped, tag = 'input window, operand 2, single buffered']
    #allocation3 [shape = 's32[1]{0}', space=sflag, size = 0x4, scoped, tag = 'scoped memory for tpu_custom_call.1']
    #allocation4 [shape = 's32[1]{0}', space=sflag, size = 0x4, scoped, tag = 'scoped memory for tpu_custom_call.1']
    #allocation5 [shape = 'u8[4096]{0}', space=vmem, size = 0x1000, scoped, tag = 'output window, operand 0, single buffered']
    %8 = vsyncpa [#allocation3], 0
    %9 = vsyncpa [#allocation4], 0
    // Predicated region
    $region2: #{tpu_custom_call.1} parent=1 // pred_check
      _
    $region3: #{tpu_custom_call.1} parent=1 // pred_check_branch
      %11 = sbr.rel (0) target = $region5
    $region4: #{tpu_custom_call.1} parent=1 // pred_region
      _
    $region5: #{tpu_custom_call.1} parent=1 // pred_fallthru
      _
    // Predicated region
    $region6: #{tpu_custom_call.1} parent=1 // pred_check
      _
    $region7: #{tpu_custom_call.1} parent=1 // pred_check_branch
      %13 = sbr.rel (0) target = $region9
    $region8: #{tpu_custom_call.1} parent=1 // pred_region
      _
    $region9: #{tpu_custom_call.1} parent=1 // pred_fallthru
      _
    // Predicated region
    $region10: #{tpu_custom_call.1} parent=1 // pred_check
      _
    $region11: #{tpu_custom_call.1} parent=1 // pred_check_branch
      %15 = sbr.rel (0) target = $region13
    $region12: #{tpu_custom_call.1} parent=1 // pred_region
      %s17 = ssub.s32 4096, 4096
      %18 = vsyncadd [#allocation3], %s17
      %s19 = sshll.u32 [#allocation2], 4
      %s20 = int_to_ptr.vmem [resolvable:$true] %s19
      %25 = dma.hbm_to_vmem [thread:$0]  %s2, 4096, %s20, [#allocation3], 128, 128, 8
    $region13: #{tpu_custom_call.1} parent=1 // pred_fallthru
      _
    // Predicated region
    $region14: #{tpu_custom_call.1} parent=1 // pred_check
      _
    $region15: #{tpu_custom_call.1} parent=1 // pred_check_branch
      %27 = sbr.rel (0) target = $region17
    $region16: #{tpu_custom_call.1} parent=1 // pred_region
      %28 = dma.done [#allocation3], 4096
    $region17: #{tpu_custom_call.1} parent=1 // pred_fallthru
      _
    %v29 = vld [vmem:[%s0] sm:$0xff]
    %v30 = vld [vmem:[%s1] sm:$0xff]
    %v31 = vlaneseq
    %v32 = vand.u32 %v31, 127
    %v33 = vadd.s32 %v32, 128
    %34 = vset.pattern.permute.xlu0 0
    %35 = vperm.xlu0 %34, %v29
    %v36 = vpop.permute.xlu0 %35
    %vm37 = vcmp.eq.s32.totalorder %v32, %v36
    %vm38 = vcmp.eq.s32.totalorder %v33, %v36
    %v39 = vsel %vm37, 1, 0
    %v40 = vsel %vm38, 1, 0
    %v41 = vcvt.s32.f32 %v39
    %v42 = vcvt.s32.f32 %v40
    %43 = vset.pattern.permute.xlu0 1
    %44 = vperm.xlu0 %43, %v29
    %v45 = vpop.permute.xlu0 %44
    %vm46 = vcmp.eq.s32.totalorder %v32, %v45
    %vm47 = vcmp.eq.s32.totalorder %v33, %v45
    %v48 = vsel %vm46, 1, 0
    %v49 = vsel %vm47, 1, 0
    %v50 = vcvt.s32.f32 %v48
    %v51 = vcvt.s32.f32 %v49
    %v52 = vadd.f32 %v41, %v50
    %v53 = vadd.f32 %v42, %v51
    %54 = vset.pattern.permute.xlu0 2
    %55 = vperm.xlu0 %54, %v29
    %v56 = vpop.permute.xlu0 %55
    %vm57 = vcmp.eq.s32.totalorder %v32, %v56
    %vm58 = vcmp.eq.s32.totalorder %v33, %v56
    %v59 = vsel %vm57, 1, 0
    %v60 = vsel %vm58, 1, 0
    %v61 = vcvt.s32.f32 %v59
    %v62 = vcvt.s32.f32 %v60
    %v63 = vadd.f32 %v52, %v61
    %v64 = vadd.f32 %v53, %v62
    %65 = vset.pattern.permute.xlu0 3
    %66 = vperm.xlu0 %65, %v29
    %v67 = vpop.permute.xlu0 %66
    %vm68 = vcmp.eq.s32.totalorder %v32, %v67
    %vm69 = vcmp.eq.s32.totalorder %v33, %v67
    %v70 = vsel %vm68, 1, 0
    %v71 = vsel %vm69, 1, 0
    %v72 = vcvt.s32.f32 %v70
    %v73 = vcvt.s32.f32 %v71
    %v74 = vadd.f32 %v63, %v72
    %v75 = vadd.f32 %v64, %v73
    %76 = vset.pattern.permute.xlu0 4
    %77 = vperm.xlu0 %76, %v29
    %v78 = vpop.permute.xlu0 %77
    %vm79 = vcmp.eq.s32.totalorder %v32, %v78
    %vm80 = vcmp.eq.s32.totalorder %v33, %v78
    %v81 = vsel %vm79, 1, 0
    %v82 = vsel %vm80, 1, 0
    %v83 = vcvt.s32.f32 %v81
    %v84 = vcvt.s32.f32 %v82
    %v85 = vadd.f32 %v74, %v83
    %v86 = vadd.f32 %v75, %v84
    %vm87 = vcmp.eq.s32.totalorder %v32, 161
    %vm88 = vcmp.eq.s32.totalorder %v33, 161
    %v89 = vsel %vm87, 1, 0
    %v90 = vsel %vm88, 1, 0
    %v91 = vcvt.s32.f32 %v89
    %v92 = vcvt.s32.f32 %v90
    %94 = vset.pattern.permute.xlu0 0
    %95 = vperm.xlu0 %94, %v30
    %v96 = vpop.permute.xlu0 %95
    %v98 = vmul.f32 %v96, %v91
    %v99 = vmul.f32 %v96, %v92
    %v100 = vadd.f32 %v85, %v98
    %v101 = vadd.f32 %v86, %v99
    %vm102 = vcmp.eq.s32.totalorder %v32, 162
    %vm103 = vcmp.eq.s32.totalorder %v33, 162
    %v104 = vsel %vm102, 1, 0
    %v105 = vsel %vm103, 1, 0
    %v106 = vcvt.s32.f32 %v104
    %v107 = vcvt.s32.f32 %v105
    %108 = vset.pattern.permute.xlu0 1
    %109 = vperm.xlu0 %108, %v30
    %v110 = vpop.permute.xlu0 %109
    %v112 = vmul.f32 %v110, %v106
    %v113 = vmul.f32 %v110, %v107
    %v114 = vadd.f32 %v100, %v112
    %v115 = vadd.f32 %v101, %v113
    %vm116 = vcmp.eq.s32.totalorder %v32, 163
    %vm117 = vcmp.eq.s32.totalorder %v33, 163
    %v118 = vsel %vm116, 1, 0
    %v119 = vsel %vm117, 1, 0
    %v120 = vcvt.s32.f32 %v118
    %v121 = vcvt.s32.f32 %v119
    %v122 = vadd.f32 %v114, %v120
    %v123 = vadd.f32 %v115, %v121
    %v124 = vld [vmem:[#allocation2] sm:$0xff]
    %v125 = vld [vmem:[#allocation2 + $0x8] sm:$0xff]
    %v126 = vld [vmem:[#allocation2 + $0x10] sm:$0xff]
    %v127 = vld [vmem:[#allocation2 + $0x18] sm:$0xff]
    %v128 = vld [vmem:[#allocation2 + $0x20] sm:$0xff]
    %v129 = vld [vmem:[#allocation2 + $0x28] sm:$0xff]
    %v130 = vld [vmem:[#allocation2 + $0x30] sm:$0xff]
    %v131 = vld [vmem:[#allocation2 + $0x38] sm:$0xff]
    %v132 = vld [vmem:[#allocation2 + $0x40] sm:$0xff]
    %v133 = vld [vmem:[#allocation2 + $0x48] sm:$0xff]
    %v134 = vld [vmem:[#allocation2 + $0x50] sm:$0xff]
    %v135 = vld [vmem:[#allocation2 + $0x58] sm:$0xff]
    %v136 = vld [vmem:[#allocation2 + $0x60] sm:$0xff]
    %v137 = vld [vmem:[#allocation2 + $0x68] sm:$0xff]
    %v138 = vld [vmem:[#allocation2 + $0x70] sm:$0xff]
    %v139 = vld [vmem:[#allocation2 + $0x78] sm:$0xff]
    %v140 = vld [vmem:[#allocation2 + $0x80] sm:$0xff]
    %v141 = vld [vmem:[#allocation2 + $0x88] sm:$0xff]
    %v142 = vld [vmem:[#allocation2 + $0x90] sm:$0xff]
    %v143 = vld [vmem:[#allocation2 + $0x98] sm:$0xff]
    %v144 = vld [vmem:[#allocation2 + $0xa0] sm:$0xff]
    %v145 = vld [vmem:[#allocation2 + $0xa8] sm:$0xff]
    %v146 = vld [vmem:[#allocation2 + $0xb0] sm:$0xff]
    %v147 = vld [vmem:[#allocation2 + $0xb8] sm:$0xff]
    %v148 = vld [vmem:[#allocation2 + $0xc0] sm:$0xff]
    %v149 = vld [vmem:[#allocation2 + $0xc8] sm:$0xff]
    %v150 = vld [vmem:[#allocation2 + $0xd0] sm:$0xff]
    %v151 = vld [vmem:[#allocation2 + $0xd8] sm:$0xff]
    %v152 = vld [vmem:[#allocation2 + $0xe0] sm:$0xff]
    %v153 = vld [vmem:[#allocation2 + $0xe8] sm:$0xff]
    %v154 = vld [vmem:[#allocation2 + $0xf0] sm:$0xff]
    %v155 = vld [vmem:[#allocation2 + $0xf8] sm:$0xff]
    %156 = vmatprep.subr.mxu0 0.0
    %157 = vmatpush1.msra.mxu0 %v124
    %158 = vmatprep.subr.mxu0 0.0
    %159 = vmatpush1.msra.mxu0 %v125
    %160 = vmatprep.subr.mxu0 0.0
    %161 = vmatpush1.msra.mxu0 %v126
    %162 = vmatprep.subr.mxu0 0.0
    %163 = vmatpush1.msra.mxu0 %v127
    %164 = vmatprep.subr.mxu0 0.0
    %165 = vmatpush1.msra.mxu0 %v128
    %166 = vmatprep.subr.mxu0 0.0
    %167 = vmatpush1.msra.mxu0 %v129
    %168 = vmatprep.subr.mxu0 0.0
    %169 = vmatpush1.msra.mxu0 %v130
    %170 = vmatprep.subr.mxu0 0.0
    %171 = vmatpush1.msra.mxu0 %v131
    %172 = vmatprep.subr.mxu0 0.0
    %173 = vmatpush1.msra.mxu0 %v132
    %174 = vmatprep.subr.mxu0 0.0
    %175 = vmatpush1.msra.mxu0 %v133
    %176 = vmatprep.subr.mxu0 0.0
    %177 = vmatpush1.msra.mxu0 %v134
    %178 = vmatprep.subr.mxu0 0.0
    %179 = vmatpush1.msra.mxu0 %v135
    %180 = vmatprep.subr.mxu0 0.0
    %181 = vmatpush1.msra.mxu0 %v136
    %182 = vmatprep.subr.mxu0 0.0
    %183 = vmatpush1.msra.mxu0 %v137
    %184 = vmatprep.subr.mxu0 0.0
    %185 = vmatpush1.msra.mxu0 %v138
    %186 = vmatprep.subr.mxu0 0.0
    %187 = vmatpush1.msra.mxu0 %v139
    %188 = vmatprep.subr.mxu0 0.0
    %189 = vmatpush1.msra.mxu0 %v140
    %190 = vmatprep.subr.mxu0 0.0
    %191 = vmatpush1.msra.mxu0 %v141
    %192 = vmatprep.subr.mxu0 0.0
    %193 = vmatpush1.msra.mxu0 %v142
    %194 = vmatprep.subr.mxu0 0.0
    %195 = vmatpush1.msra.mxu0 %v143
    %196 = vmatprep.subr.mxu0 0.0
    %197 = vmatpush1.msra.mxu0 %v144
    %198 = vmatprep.subr.mxu0 0.0
    %199 = vmatpush1.msra.mxu0 %v145
    %200 = vmatprep.subr.mxu0 0.0
    %201 = vmatpush1.msra.mxu0 %v146
    %202 = vmatprep.subr.mxu0 0.0
    %203 = vmatpush1.msra.mxu0 %v147
    %204 = vmatprep.subr.mxu0 0.0
    %205 = vmatpush1.msra.mxu0 %v148
    %206 = vmatprep.subr.mxu0 0.0
    %207 = vmatpush1.msra.mxu0 %v149
    %208 = vmatprep.subr.mxu0 0.0
    %209 = vmatpush1.msra.mxu0 %v150
    %210 = vmatprep.subr.mxu0 0.0
    %211 = vmatpush1.msra.mxu0 %v151
    %212 = vmatprep.subr.mxu0 0.0
    %213 = vmatpush1.msra.mxu0 %v152
    %214 = vmatprep.subr.mxu0 0.0
    %215 = vmatpush1.msra.mxu0 %v153
    %216 = vmatprep.subr.mxu0 0.0
    %217 = vmatpush1.msra.mxu0 %v154
    %218 = vmatprep.subr.mxu0 0.0
    %219 = vmatpush1.msra.mxu0 %v155
    %220 = vmatprep.mubr.f32.mxu0 %v123
    %221 = vmatmul.mubr.f32.gmra.mrb[0].mxu0 %v122
    %v222 = vpop.f32.mrb[0].mxu0
    %v223 = vadd.f32 0.0, %v222
    %v224 = vpop.f32.mrb[0].mxu0
    %225 = vdwg.mxu0
    %226 = vst [vmem:[#allocation5] sm:$0xff] %v223
    // Predicated region
    $region18: #{tpu_custom_call.1} parent=1 // pred_check
      _
    $region19: #{tpu_custom_call.1} parent=1 // pred_check_branch
      %228 = sbr.rel (0) target = $region21
    $region20: #{tpu_custom_call.1} parent=1 // pred_region
      %s230 = ssub.s32 128, 128
      %231 = vsyncadd [#allocation4], %s230
      %s233 = sshll.u32 [#allocation5], 4
      %s234 = int_to_ptr.vmem [resolvable:$true] %s233
      %236 = dma.vmem_to_hbm [thread:$0]  %s234, 128, %s3, [#allocation4]
    $region21: #{tpu_custom_call.1} parent=1 // pred_fallthru
      _
    // Predicated region
    $region22: #{tpu_custom_call.1} parent=1 // pred_check
      _
    $region23: #{tpu_custom_call.1} parent=1 // pred_check_branch
      %238 = sbr.rel (0) target = $region25
    $region24: #{tpu_custom_call.1} parent=1 // pred_region
      %239 = dma.done [#allocation4], 128
    $region25: #{tpu_custom_call.1} parent=1 // pred_fallthru
      _
    %240 = vsyncpa [#allocation3], 1
    %241 = vsyncpa [#allocation4], 1

</llo_original>
